<compile_context>
chip_gen: v6e
topology: v6e:2x2x1
jax: 0.10.0
libtpu: 0.0.40
codegen_flags: <defaults>
</compile_context>

<pallas_src>
import math
import functools

import jax
import jax.numpy as jnp
from jax import lax
from jax.experimental import pallas as pl
from jax.experimental.pallas import tpu as pltpu


# ---------------------------------------------------------------------------
# Shared activation math (used by the kernel body and by the tiny tail path)
# ---------------------------------------------------------------------------
def _act_math(xf, act: str):
    if act in ("silu", "swish"):
        return xf * jax.nn.sigmoid(xf)                       # exact sigmoid
    if act == "sigmoid":
        return jax.nn.sigmoid(xf)
    if act == "tanh":
        return jnp.tanh(xf)
    if act == "gelu":
        # Exact erf GELU — matches HF/PyTorch get_activation('gelu').
        return 0.5 * xf * (1.0 + lax.erf(xf * (1.0 / math.sqrt(2.0))))
    if act in ("gelu_new", "gelu_pytorch_tanh", "gelu_tanh"):
        c = math.sqrt(2.0 / math.pi)
        return 0.5 * xf * (1.0 + jnp.tanh(c * (xf + 0.044715 * xf * xf * xf)))
    if act == "quick_gelu":
        return xf * jax.nn.sigmoid(1.702 * xf)
    if act == "mish":
        return xf * jnp.tanh(jax.nn.softplus(xf))
    if act == "relu6":
        return jnp.clip(xf, 0.0, 6.0)
    # TODO(synk): remaining HF activation strings can be added here as needed.
    raise NotImplementedError(f"activation '{act}' not supported")


# ---------------------------------------------------------------------------
# Kernel
# ---------------------------------------------------------------------------
def _activation_kernel(x_ref, o_ref, *, act: str, upcast: bool):
    """Elementwise activation on one (block_rows, width) VMEM tile."""
    x = x_ref[...]

    if act == "relu":
        # Cheap activation: compute natively in the input dtype.
        o_ref[...] = jnp.maximum(x, 0)
        return

    # Transcendental activations: f32 upcast only where the VPU/EUP have no
    # native path for the input dtype (v5e / fp16 / fp8); bf16 stays native
    # on v6e/v7x, f32 stays f32.
    xf = x.astype(jnp.float32) if upcast else x
    o_ref[...] = _act_math(xf, act).astype(o_ref.dtype)


# ---------------------------------------------------------------------------
# Helpers
# ---------------------------------------------------------------------------
_TARGET_BLOCK_BYTES = 4 * 1024 * 1024     # ~4 MiB per block, any dtype
_VMEM_LIMIT_BYTES = 48 * 1024 * 1024      # in+out double-buffered ≈16 MiB << 48 MiB


def _choose_width(n: int) -> int:
    """Largest lane-dense slab width dividing n (n is a multiple of 128)."""
    for w in (1024, 512, 256, 128):
        if n % w == 0:
            return w
    raise AssertionError("n must be a multiple of 128 here")


def _needs_f32_upcast(dtype) -> bool:
    dt = jnp.dtype(dtype)
    if dt == jnp.dtype(jnp.float32):
        return False
    if dt == jnp.dtype(jnp.bfloat16):
        kind = ""
        try:
            kind = jax.devices()[0].device_kind.lower()
        except Exception:
            pass
        # v6e/v7x VPU & EUP have native bf16; v5e/v4 (and CPU interpret) do not.
        return not any(tag in kind for tag in ("v6", "v7"))
    return True


def _activation_jnp(x, act: str, upcast: bool):
    """Plain-XLA path for sub-128-element tails (rare, tiny)."""
    if act == "relu":
        return jnp.maximum(x, 0)
    xf = x.astype(jnp.float32) if upcast else x
    return _act_math(xf, act).astype(x.dtype)


# ---------------------------------------------------------------------------
# Wrapper (equivalent of Activations(activation_type).forward(x))
# ---------------------------------------------------------------------------
def activations_forward(x: jax.Array, activation_type: str = "gelu_new") -> jax.Array:
    """Apply `activation_type` elementwise to `x` using a Pallas TPU kernel."""
    orig_shape = x.shape
    dtype = x.dtype
    itemsize = jnp.dtype(dtype).itemsize

    flat = x.reshape(-1)                 # free: contiguous row-major view
    n = flat.shape[0]
    if n == 0:
        return x

    upcast = _needs_f32_upcast(dtype)
    kernel = functools.partial(_activation_kernel, act=activation_type, upcast=upcast)

    def run_kernel_2d(x2d, block_rows, width, grid_len):
        elems = x2d.size
        return pl.pallas_call(
            kernel,
            out_shape=jax.ShapeDtypeStruct(x2d.shape, dtype),
            grid=(grid_len,),
            in_specs=[pl.BlockSpec((block_rows, width), lambda i: (i, 0))],
            out_specs=pl.BlockSpec((block_rows, width), lambda i: (i, 0)),
            compiler_params=pltpu.CompilerParams(
                dimension_semantics=("parallel",),      # shards across v7x TCs
                vmem_limit_bytes=_VMEM_LIMIT_BYTES,
            ),
            cost_estimate=pl.CostEstimate(
                flops=8 * elems,
                transcendentals=0 if activation_type == "relu" else elems,
                bytes_accessed=2 * elems * itemsize,
            ),
        )(x2d)

    n_tail = n % 128
    n_main = n - n_tail

    if n_main == 0:
        # Whole tensor is smaller than one lane row: a single full-extent
        # (1, n) block is legal and needs no padding at all.
        y2d = run_kernel_2d(flat.reshape(1, n), 1, n, 1)
        return y2d.reshape(orig_shape)

    width = _choose_width(n_main)
    rows = n_main // width

    # Byte-budget block: ~4 MiB regardless of dtype, (8,128)-aligned.
    target_elems = max(_TARGET_BLOCK_BYTES // itemsize, 8 * 128)
    desired_rows = max(target_elems // width, 8)
    if desired_rows >= rows:
        if rows >= 16:
            # Split into >=2 blocks so both v7x TensorCores engage.
            half = (rows + 1) // 2
            block_rows = ((half + 7) // 8) * 8
        else:
            block_rows = rows            # full extent (always legal)
    else:
        block_rows = (desired_rows // 8) * 8
    grid_len = pl.cdiv(rows, block_rows)  # ragged last block handled by Pallas

    x2d = flat[:n_main].reshape(rows, width)
    y_main = run_kernel_2d(x2d, block_rows, width, grid_len).reshape(n_main)

    if n_tail == 0:
        return y_main.reshape(orig_shape)

    # Rare fallback: <128-element tail handled by plain XLA (no full-array
    # pad/slice; only the concat below touches the whole output once).
    # TODO(synk): a masked final block via pltpu.store would avoid the concat.
    y_tail = _activation_jnp(flat[n_main:], activation_type, upcast)
    return jnp.concatenate([y_main, y_tail]).reshape(orig_shape)


# ---------------------------------------------------------------------------
# Demo / smoke test
# ---------------------------------------------------------------------------
if __name__ == "__main__":
    key = jax.random.PRNGKey(0)
    c = math.sqrt(2.0 / math.pi)

    def gelu_new_ref(x):
        return 0.5 * x * (1.0 + jnp.tanh(c * (x + 0.044715 * x ** 3)))

    # Small NCHW-style input consistent with the reference module.
    x = jax.random.normal(key, (2, 4, 16, 16), dtype=jnp.float32)

    # gelu_new (tanh-approx GELU).
    y = jax.block_until_ready(activations_forward(x, "gelu_new"))
    assert y.shape == x.shape and y.dtype == x.dtype
    assert jnp.max(jnp.abs(y - gelu_new_ref(x))) < 1e-5

    # relu — native-dtype path.
    y_relu = jax.block_until_ready(activations_forward(x, "relu"))
    assert jnp.max(jnp.abs(y_relu - jnp.maximum(x, 0.0))) == 0.0

    # silu — exact sigmoid path (tight tolerance now).
    y_silu = jax.block_until_ready(activations_forward(x, "silu"))
    assert jnp.max(jnp.abs(y_silu - x * jax.nn.sigmoid(x))) < 1e-6

    # sigmoid / tanh — exact paths.
    y_sig = jax.block_until_ready(activations_forward(x, "sigmoid"))
    assert jnp.max(jnp.abs(y_sig - jax.nn.sigmoid(x))) < 1e-6
    y_tanh = jax.block_until_ready(activations_forward(x, "tanh"))
    assert jnp.max(jnp.abs(y_tanh - jnp.tanh(x))) < 1e-6

    # Larger tensor exercising the multi-block (2-block, dual-TC-capable) path.
    xb = jax.random.normal(key, (8, 64, 64, 64), dtype=jnp.float32)  # 2M elems
    yb = jax.block_until_ready(activations_forward(xb, "gelu_new"))
    assert jnp.max(jnp.abs(yb - gelu_new_ref(xb))) < 1e-5

    # Odd-sized input (<128 elems): single full-extent block, no padding.
    xo = jax.random.normal(key, (3, 5, 7), dtype=jnp.float32)
    yo = jax.block_until_ready(activations_forward(xo, "relu"))
    assert jnp.max(jnp.abs(yo - jnp.maximum(xo, 0.0))) == 0.0

    # Odd-sized larger input exercising the prefix-kernel + XLA-tail path.
    xt = jax.random.normal(key, (7, 131), dtype=jnp.float32)  # 917 = 7*128 + 21
    yt = jax.block_until_ready(activations_forward(xt, "silu"))
    assert jnp.max(jnp.abs(yt - xt * jax.nn.sigmoid(xt))) < 1e-6

    print("KERNEL_OK")
</pallas_src>

<mosaic_0001>
module attributes {stable_mosaic.version = 11 : i64} {
  func.func @_activation_kernel(%arg0: i32, %arg1: memref<2x1024xf32, #tpu.memory_space<vmem>>, %arg2: memref<2x1024xf32, #tpu.memory_space<vmem>>) attributes {dimension_semantics = [#tpu.dimension_semantics<parallel>], iteration_bounds = array<i64: 1>, scalar_prefetch = 0 : i64, scratch_operands = 0 : i64, tpu.core_type = #tpu.core_type<tc>, window_params = [{transform_indices = @transform_0, window_bounds = array<i64: 2, 1024>}, {transform_indices = @transform_1, window_bounds = array<i64: 2, 1024>}]} {
    %c0 = arith.constant 0 : index
    %c0_0 = arith.constant 0 : index
    %0 = vector.load %arg1[%c0, %c0_0] : memref<2x1024xf32, #tpu.memory_space<vmem>>, vector<2x1024xf32>
    %cst = arith.constant 5.000000e-01 : f32
    %1 = vector.broadcast %cst : f32 to vector<2x1024xf32>
    %2 = arith.mulf %1, %0 : vector<2x1024xf32>
    %cst_1 = arith.constant 4.471500e-02 : f32
    %3 = vector.broadcast %cst_1 : f32 to vector<2x1024xf32>
    %4 = arith.mulf %3, %0 : vector<2x1024xf32>
    %5 = arith.mulf %4, %0 : vector<2x1024xf32>
    %6 = arith.mulf %5, %0 : vector<2x1024xf32>
    %7 = arith.addf %0, %6 : vector<2x1024xf32>
    %cst_2 = arith.constant 0.797884583 : f32
    %8 = vector.broadcast %cst_2 : f32 to vector<2x1024xf32>
    %9 = arith.mulf %8, %7 : vector<2x1024xf32>
    %10 = math.tanh %9 : vector<2x1024xf32>
    %cst_3 = arith.constant 1.000000e+00 : f32
    %11 = vector.broadcast %cst_3 : f32 to vector<2x1024xf32>
    %12 = arith.addf %11, %10 : vector<2x1024xf32>
    %13 = arith.mulf %2, %12 : vector<2x1024xf32>
    %c0_4 = arith.constant 0 : index
    %c0_5 = arith.constant 0 : index
    %14 = vector.load %arg2[%c0_4, %c0_5] : memref<2x1024xf32, #tpu.memory_space<vmem>>, vector<2x1024xf32>
    tpu.vector_store %arg2[%c0_4, %c0_5], %13 {strides = array<i32>} : memref<2x1024xf32, #tpu.memory_space<vmem>>, vector<2x1024xf32>,
    return
  }
  func.func @transform_0(%arg0: i32) -> (i32, i32) {
    %c0_i32 = arith.constant 0 : i32
    %c0_i32_0 = arith.constant 0 : i32
    return %arg0, %c0_i32 : i32, i32
  }
  func.func @transform_1(%arg0: i32) -> (i32, i32) {
    %c0_i32 = arith.constant 0 : i32
    %c0_i32_0 = arith.constant 0 : i32
    return %arg0, %c0_i32 : i32, i32
  }
}

</mosaic_0001>

<llo_original>
// kernel: tpu_custom_call.1
$region0: #{tpu_custom_call.1}
  #allocation0 [shape = 'u32[]', space=smem, size = 0x4, offset = 0x4, fixed_abs, tag = 'smem constant byte address 0x4 - core index']
  #allocation1 [shape = 'u32[144,128]{1,0:T(1,128)}', space=vmem, size = 0x12000, scoped, tag = 'internal scratch']
  %s0 = inlined_call_operand.hbm [shape: f32[2,1024], index: 0, kind: input, shape index: {}]
  %s1 = inlined_call_operand.hbm [shape: f32[2,1024], index: 1, kind: output, shape index: {}]
  %s2 = sld [smem:[#allocation0]]
  $region18: #{tpu_custom_call.1} parent=0
    _
  %s4 = ssub.s32 1, %s2
  %s5 = scalar_select 0, %s4, %s2
  $region1: #{tpu_custom_call.1} parent=0
    #allocation2 [shape = 'u8[8192]{0}', space=vmem, size = 0x2000, scoped, tag = 'input window, operand 0, single buffered']
    #allocation3 [shape = 's32[1]{0}', space=sflag, size = 0x4, scoped, tag = 'scoped memory for tpu_custom_call.1']
    #allocation4 [shape = 's32[1]{0}', space=sflag, size = 0x4, scoped, tag = 'scoped memory for tpu_custom_call.1']
    #allocation5 [shape = 'u8[8192]{0}', space=vmem, size = 0x2000, scoped, tag = 'output window, operand 0, single buffered']
    %6 = vsyncpa [#allocation3], 0
    %7 = vsyncpa [#allocation4], 0
    // Predicated region
    $region2: #{tpu_custom_call.1} parent=1 // pred_check
      _
    $region3: #{tpu_custom_call.1} parent=1 // pred_check_branch
      %9 = sbr.rel (0) target = $region5
    $region4: #{tpu_custom_call.1} parent=1 // pred_region
      %s11 = ssub.s32 256, 256
      %12 = vsyncadd [#allocation3], %s11
      %s14 = sshll.u32 [#allocation2], 4
      %s15 = int_to_ptr.vmem [resolvable:$true] %s14
      %17 = dma.hbm_to_vmem [thread:$0]  %s0, 256, %s15, [#allocation3]
    $region5: #{tpu_custom_call.1} parent=1 // pred_fallthru
      _
    // Predicated region
    $region6: #{tpu_custom_call.1} parent=1 // pred_check
      _
    $region7: #{tpu_custom_call.1} parent=1 // pred_check_branch
      %19 = sbr.rel (0) target = $region9
    $region8: #{tpu_custom_call.1} parent=1 // pred_region
      %20 = dma.done [#allocation3], 256
    $region9: #{tpu_custom_call.1} parent=1 // pred_fallthru
      _
    %v21 = vld [vmem:[#allocation2] sm:$0xff]
    %v22 = vld [vmem:[#allocation2 + $0x8] sm:$0xff]
    %v23 = vmul.f32 %v21, 0.5
    %v24 = vmul.f32 %v22, 0.5
    %v25 = vmul.f32 %v21, 0.044715
    %v26 = vmul.f32 %v22, 0.044715
    %v27 = vmul.f32 %v25, %v21
    %v28 = vmul.f32 %v26, %v22
    %v29 = vmul.f32 %v27, %v21
    %v30 = vmul.f32 %v28, %v22
    %v31 = vadd.f32 %v21, %v29
    %v32 = vadd.f32 %v22, %v30
    %v33 = vmul.f32 %v31, 0.7978846
    %v34 = vmul.f32 %v32, 0.7978846
    %v35 = vtanh.pop %v33
    %v36 = vtanh.pop %v34
    %v37 = vadd.f32 %v35, 1.0
    %v38 = vadd.f32 %v36, 1.0
    %v39 = vmul.f32 %v23, %v37
    %v40 = vmul.f32 %v24, %v38
    %41 = vst [vmem:[#allocation5] sm:$0xff] %v39
    %42 = vst [vmem:[#allocation5 + $0x8] sm:$0xff] %v40
    // Predicated region
    $region10: #{tpu_custom_call.1} parent=1 // pred_check
      _
    $region11: #{tpu_custom_call.1} parent=1 // pred_check_branch
      %44 = sbr.rel (0) target = $region13
    $region12: #{tpu_custom_call.1} parent=1 // pred_region
      %s46 = ssub.s32 256, 256
      %47 = vsyncadd [#allocation4], %s46
      %s49 = sshll.u32 [#allocation5], 4
      %s50 = int_to_ptr.vmem [resolvable:$true] %s49
      %52 = dma.vmem_to_hbm [thread:$0]  %s50, 256, %s1, [#allocation4]
    $region13: #{tpu_custom_call.1} parent=1 // pred_fallthru
      _
    // Predicated region
    $region14: #{tpu_custom_call.1} parent=1 // pred_check
      _
    $region15: #{tpu_custom_call.1} parent=1 // pred_check_branch
      %54 = sbr.rel (0) target = $region17
    $region16: #{tpu_custom_call.1} parent=1 // pred_region
      %55 = dma.done [#allocation4], 256
    $region17: #{tpu_custom_call.1} parent=1 // pred_fallthru
      _
    %56 = vsyncpa [#allocation3], 1
    %57 = vsyncpa [#allocation4], 1

</llo_original>
